<compile_context>
chip_gen: v7x
topology: tpu7x:2x2x1
jax: 0.10.0
libtpu: 0.0.40
codegen_flags: <defaults>
</compile_context>

<pallas_src>
import numpy as np
import jax
import jax.numpy as jnp
from jax.experimental import pallas as pl
from jax.experimental.pallas import tpu as pltpu


def _make_stack_kernel(n_layers):
    """act = relu(act @ W_l + shift_l) for each layer; one MXU dot per layer."""
    def kernel(*refs):
        x_ref = refs[0]
        out_ref = refs[1 + 2 * n_layers]
        act = x_ref[...].astype(jnp.float32)              # (B_BLK, Cin*H*W)
        for l in range(n_layers):                         # static, tiny (#layers)
            w_ref = refs[1 + 2 * l]                       # (K_in, K_out) conv*BN folded
            s_ref = refs[2 + 2 * l]                       # (1, K_out)   bias/BN shift
            act = jnp.dot(act, w_ref[...],
                          preferred_element_type=jnp.float32)
            act = jnp.maximum(act + s_ref[...], 0.0)      # shift + ReLU epilogue
            # TODO(synk): Dropout2d is identity in eval mode; training-mode channel
            # dropout and batch-statistics BatchNorm are not reproduced here.
        out_ref[...] = act.astype(out_ref.dtype)          # lane-dense flattened output
    return kernel


def _build_layer_ops(layers, hin, win, eps=1e-5):
    """Fold conv bias + BN(inference) and lower each strided 'valid' conv layer to a
    dense matmul operator (host-side, done once per input spatial size).

    Activation flat order is channel-major (c, h, w) at every stage, i.e. the plain
    NCHW flattening (same order PyTorch's x.view(-1, C*H*W) uses on the output).
    Returns a list of (W_big (K_in, K_out) f32, shift (1, K_out) f32).
    """
    ops = []
    for (w, b, g, bt, m, v, s) in layers:
        w = np.asarray(w, np.float32); b = np.asarray(b, np.float32)
        g = np.asarray(g, np.float32); bt = np.asarray(bt, np.float32)
        m = np.asarray(m, np.float32); v = np.asarray(v, np.float32)
        kh_n, kw_n, cin, cout = w.shape
        s = int(s)
        ho = (hin - kh_n) // s + 1
        wo = (win - kw_n) // s + 1

        # relu(((x*w + b) - m)/sqrt(v+eps)*g + bt) == relu(x*(w*scale) + shift)
        scale = g / np.sqrt(v + eps)                       # (Cout,)
        wf = w * scale[None, None, None, :]                # BN scale folded into weights
        shift = (b - m) * scale + bt                       # conv bias + BN shift

        # Dense Toeplitz operator:
        #   W_big[(ci, oh*s+kh, ow*s+kw), (co, oh, ow)] = wf[kh, kw, ci, co]
        wbig = np.zeros((cin, hin, win, cout, ho, wo), np.float32)
        for kh in range(kh_n):
            for kw in range(kw_n):
                for oh in range(ho):
                    for ow in range(wo):
                        wbig[:, kh + s * oh, kw + s * ow, :, oh, ow] = wf[kh, kw]
        wbig = wbig.reshape(cin * hin * win, cout * ho * wo)
        shift_flat = np.repeat(shift, ho * wo).reshape(1, cout * ho * wo)

        ops.append((jnp.asarray(wbig), jnp.asarray(shift_flat)))
        hin, win = ho, wo
    return ops


def conv_stack_forward(x_flat, ops):
    """x_flat: (N, Cin*H*W) NCHW-flattened images -> (N, C_L*Ho_L*Wo_L) features."""
    n, k0 = x_flat.shape
    k_out = ops[-1][0].shape[1]

    # Batch blocking: one grid step for small N (no per-step overhead); for large N,
    # 256-image blocks (multiple of 8 sublanes) pipelined over a "parallel" grid.
    b_blk = n if n <= 256 else 256
    n_pad = ((n + b_blk - 1) // b_blk) * b_blk
    x_pad = jnp.pad(x_flat, ((0, n_pad - n), (0, 0))) if n_pad != n else x_flat

    in_specs = [pl.BlockSpec((b_blk, k0), lambda i: (i, 0))]
    inputs = [x_pad]
    for wbig, shift in ops:
        kin, kout = wbig.shape
        in_specs.append(pl.BlockSpec((kin, kout), lambda i: (0, 0)))
        in_specs.append(pl.BlockSpec((1, kout), lambda i: (0, 0)))
        inputs += [wbig, shift]

    out = pl.pallas_call(
        _make_stack_kernel(len(ops)),
        out_shape=jax.ShapeDtypeStruct((n_pad, k_out), jnp.float32),
        grid=(n_pad // b_blk,),
        in_specs=in_specs,
        out_specs=pl.BlockSpec((b_blk, k_out), lambda i: (i, 0)),
        compiler_params=pltpu.CompilerParams(dimension_semantics=("parallel",)),
    )(*inputs)
    return out[:n] if n_pad != n else out


class ConvPallas:
    """JAX/Pallas counterpart of the PyTorch `Conv` module (inference mode)."""

    def __init__(self, params, key, module_name='Default'):
        if params is None:
            raise ValueError('Creating a NULL fully connected block')
        for k in ('channels', 'kernels', 'strides', 'dropouts', 'end_layer'):
            if k not in params:
                raise ValueError(f' Missing the {k} parameter ')
        if len(params['dropouts']) != len(params['channels']) - 1:
            raise ValueError('Dropouts should be from the len of channel_sizes minus 1')

        channels, kernels, strides = params['channels'], params['kernels'], params['strides']
        self.module_name = module_name
        self.layers = []
        for i in range(len(channels) - 1):
            key, k_w, k_b, k_g, k_bt = jax.random.split(key, 5)
            cin, cout, kk = channels[i], channels[i + 1], kernels[i]
            w = 0.1 * jax.random.normal(k_w, (kk, kk, cin, cout), jnp.float32)
            b = 0.1 * jax.random.normal(k_b, (cout,), jnp.float32)
            gamma = 1.0 + 0.1 * jax.random.normal(k_g, (cout,), jnp.float32)
            beta = 0.1 * jax.random.normal(k_bt, (cout,), jnp.float32)
            mean = jnp.zeros((cout,), jnp.float32)   # BN running stats (inference mode)
            var = jnp.ones((cout,), jnp.float32)
            self.layers.append((w, b, gamma, beta, mean, var, int(strides[i])))
        self._op_cache = {}                          # (H, W) -> fused per-layer operators

    def __call__(self, x_nchw):
        n, c, h, w = x_nchw.shape
        if (h, w) not in self._op_cache:
            self._op_cache[(h, w)] = _build_layer_ops(self.layers, h, w)
        ops = self._op_cache[(h, w)]
        # NCHW flattening is exactly the row order W_big expects: no transpose needed,
        # and the kernel output is already in PyTorch's x.view(-1, C*H*W) order.
        x_flat = x_nchw.reshape(n, c * h * w)
        return conv_stack_forward(x_flat, ops)


def _reference_forward(layers, x_nchw, eps=1e-5):
    """Pure-JAX reference (lax.conv) for validation."""
    x = jnp.transpose(x_nchw, (0, 2, 3, 1))          # NHWC
    for (w, b, g, bt, m, v, s) in layers:
        y = jax.lax.conv_general_dilated(
            x, w, window_strides=(s, s), padding='VALID',
            dimension_numbers=('NHWC', 'HWIO', 'NHWC'),
            precision=jax.lax.Precision.HIGHEST)
        y = (y + b - m) / jnp.sqrt(v + eps) * g + bt
        x = jnp.maximum(y, 0.0)
    x = jnp.transpose(x, (0, 3, 1, 2))                # back to NCHW for PyTorch flatten
    return x.reshape(x.shape[0], -1)


if __name__ == "__main__":
    params = {
        'channels': [3, 8, 16],
        'kernels': [3, 3],
        'strides': [2, 2],
        'dropouts': [0.0, 0.0],
        'end_layer': True,
    }
    key = jax.random.PRNGKey(0)
    key, k_in = jax.random.split(key)

    model = ConvPallas(params, key)
    x = jax.random.normal(k_in, (2, 3, 16, 16), jnp.float32)   # NCHW like PyTorch

    out = jax.block_until_ready(model(x))
    # layer1: 16 -> 7, layer2: 7 -> 3, flatten = 16*3*3 = 144
    assert out.shape == (2, 144), out.shape

    ref = jax.block_until_ready(_reference_forward(model.layers, x))
    max_err = float(jnp.max(jnp.abs(out - ref)))
    assert jnp.allclose(out, ref, rtol=1e-2, atol=1e-2), max_err

    print("KERNEL_OK")
</pallas_src>

<mosaic_0001>
module attributes {stable_mosaic.version = 11 : i64} {
  func.func @kernel(%arg0: i32, %arg1: memref<2x768xf32, #tpu.memory_space<vmem>>, %arg2: memref<768x392xf32, #tpu.memory_space<vmem>>, %arg3: memref<1x392xf32, #tpu.memory_space<vmem>>, %arg4: memref<392x144xf32, #tpu.memory_space<vmem>>, %arg5: memref<1x144xf32, #tpu.memory_space<vmem>>, %arg6: memref<2x144xf32, #tpu.memory_space<vmem>>) attributes {dimension_semantics = [#tpu.dimension_semantics<parallel>], iteration_bounds = array<i64: 1>, scalar_prefetch = 0 : i64, scratch_operands = 0 : i64, tpu.core_type = #tpu.core_type<tc>, window_params = [{transform_indices = @transform_0, window_bounds = array<i64: 2, 768>}, {pipeline_mode = #tpu.pipeline_mode<synchronous>, transform_indices = @transform_1, window_bounds = array<i64: 768, 392>}, {pipeline_mode = #tpu.pipeline_mode<synchronous>, transform_indices = @transform_2, window_bounds = array<i64: 1, 392>}, {pipeline_mode = #tpu.pipeline_mode<synchronous>, transform_indices = @transform_3, window_bounds = array<i64: 392, 144>}, {pipeline_mode = #tpu.pipeline_mode<synchronous>, transform_indices = @transform_4, window_bounds = array<i64: 1, 144>}, {transform_indices = @transform_5, window_bounds = array<i64: 2, 144>}]} {
    %c0 = arith.constant 0 : index
    %c0_0 = arith.constant 0 : index
    %0 = vector.load %arg1[%c0, %c0_0] : memref<2x768xf32, #tpu.memory_space<vmem>>, vector<2x768xf32>
    %c0_1 = arith.constant 0 : index
    %c0_2 = arith.constant 0 : index
    %1 = vector.load %arg2[%c0_1, %c0_2] : memref<768x392xf32, #tpu.memory_space<vmem>>, vector<768x392xf32>
    %cst = arith.constant dense<0.000000e+00> : vector<2x392xf32>
    %2 = tpu.matmul %0, %1, %cst {dimension_numbers = #tpu.dot_dimension_numbers<[1], [0], [0], [1], [0, 0, 1, 1], [], []>} : vector<2x768xf32>, vector<768x392xf32>, vector<2x392xf32> -> vector<2x392xf32>
    %c0_3 = arith.constant 0 : index
    %c0_4 = arith.constant 0 : index
    %3 = vector.load %arg3[%c0_3, %c0_4] : memref<1x392xf32, #tpu.memory_space<vmem>>, vector<1x392xf32>
    %4 = vector.broadcast %3 : vector<1x392xf32> to vector<2x392xf32>
    %5 = arith.addf %2, %4 : vector<2x392xf32>
    %cst_5 = arith.constant 0.000000e+00 : f32
    %6 = vector.broadcast %cst_5 : f32 to vector<2x392xf32>
    %7 = arith.maximumf %5, %6 : vector<2x392xf32>
    %c0_6 = arith.constant 0 : index
    %c0_7 = arith.constant 0 : index
    %8 = vector.load %arg4[%c0_6, %c0_7] : memref<392x144xf32, #tpu.memory_space<vmem>>, vector<392x144xf32>
    %cst_8 = arith.constant dense<0.000000e+00> : vector<2x144xf32>
    %9 = tpu.matmul %7, %8, %cst_8 {dimension_numbers = #tpu.dot_dimension_numbers<[1], [0], [0], [1], [0, 0, 1, 1], [], []>} : vector<2x392xf32>, vector<392x144xf32>, vector<2x144xf32> -> vector<2x144xf32>
    %c0_9 = arith.constant 0 : index
    %c0_10 = arith.constant 0 : index
    %10 = vector.load %arg5[%c0_9, %c0_10] : memref<1x144xf32, #tpu.memory_space<vmem>>, vector<1x144xf32>
    %11 = vector.broadcast %10 : vector<1x144xf32> to vector<2x144xf32>
    %12 = arith.addf %9, %11 : vector<2x144xf32>
    %cst_11 = arith.constant 0.000000e+00 : f32
    %13 = vector.broadcast %cst_11 : f32 to vector<2x144xf32>
    %14 = arith.maximumf %12, %13 : vector<2x144xf32>
    %c0_12 = arith.constant 0 : index
    %c0_13 = arith.constant 0 : index
    %15 = vector.load %arg6[%c0_12, %c0_13] : memref<2x144xf32, #tpu.memory_space<vmem>>, vector<2x144xf32>
    tpu.vector_store %arg6[%c0_12, %c0_13], %14 {strides = array<i32>} : memref<2x144xf32, #tpu.memory_space<vmem>>, vector<2x144xf32>,
    return
  }
  func.func @transform_0(%arg0: i32) -> (i32, i32) {
    %c0_i32 = arith.constant 0 : i32
    %c0_i32_0 = arith.constant 0 : i32
    return %arg0, %c0_i32 : i32, i32
  }
  func.func @transform_1(%arg0: i32) -> (i32, i32) {
    %c0_i32 = arith.constant 0 : i32
    %c0_i32_0 = arith.constant 0 : i32
    %c0_i32_1 = arith.constant 0 : i32
    return %c0_i32, %c0_i32_0 : i32, i32
  }
  func.func @transform_2(%arg0: i32) -> (i32, i32) {
    %c0_i32 = arith.constant 0 : i32
    %c0_i32_0 = arith.constant 0 : i32
    %c0_i32_1 = arith.constant 0 : i32
    return %c0_i32, %c0_i32_0 : i32, i32
  }
  func.func @transform_3(%arg0: i32) -> (i32, i32) {
    %c0_i32 = arith.constant 0 : i32
    %c0_i32_0 = arith.constant 0 : i32
    %c0_i32_1 = arith.constant 0 : i32
    return %c0_i32, %c0_i32_0 : i32, i32
  }
  func.func @transform_4(%arg0: i32) -> (i32, i32) {
    %c0_i32 = arith.constant 0 : i32
    %c0_i32_0 = arith.constant 0 : i32
    %c0_i32_1 = arith.constant 0 : i32
    return %c0_i32, %c0_i32_0 : i32, i32
  }
  func.func @transform_5(%arg0: i32) -> (i32, i32) {
    %c0_i32 = arith.constant 0 : i32
    %c0_i32_0 = arith.constant 0 : i32
    return %arg0, %c0_i32 : i32, i32
  }
}

</mosaic_0001>

<llo_original>
// kernel: tpu_custom_call.1
$region0: #{tpu_custom_call.1}
  #allocation0 [shape = 'u32[]', space=smem, size = 0x4, offset = 0x4, fixed_abs, tag = 'smem constant byte address 0x4 - core index']
  #allocation1 [shape = 'u32[144,128]{1,0:T(1,128)}', space=vmem, size = 0x12000, scoped, tag = 'internal scratch']
  %s0 = inlined_call_operand.vmem [shape: f32[2,768], index: 0, kind: input, shape index: {}]
  %s1 = inlined_call_operand.vmem [shape: f32[768,392], index: 1, kind: input, shape index: {}]
  %s2 = inlined_call_operand.vmem [shape: f32[1,392], index: 2, kind: input, shape index: {}]
  %s3 = inlined_call_operand.vmem [shape: f32[392,144], index: 3, kind: input, shape index: {}]
  %s4 = inlined_call_operand.vmem [shape: f32[1,144], index: 4, kind: input, shape index: {}]
  %s5 = inlined_call_operand.hbm [shape: f32[2,144], index: 5, kind: output, shape index: {}]
  %s6 = sld [smem:[#allocation0]]
  $region30: #{tpu_custom_call.1} parent=0
    _
  %s8 = ssub.s32 1, %s6
  %s9 = scalar_select 0, %s8, %s6
  $region1: #{tpu_custom_call.1} parent=0
    #allocation2 [shape = 'u8[2048]{0}', space=vmem, size = 0x800, scoped, tag = 'output window, operand 0, single buffered']
    #allocation3 [shape = 's32[1]{0}', space=sflag, size = 0x4, scoped, tag = 'scoped memory for tpu_custom_call.1']
    %10 = vsyncpa [#allocation3], 0
    // Predicated region
    $region2: #{tpu_custom_call.1} parent=1 // pred_check
      _
    $region3: #{tpu_custom_call.1} parent=1 // pred_check_branch
      %12 = sbr.rel (0) target = $region5
    $region4: #{tpu_custom_call.1} parent=1 // pred_region
      _
    $region5: #{tpu_custom_call.1} parent=1 // pred_fallthru
      _
    // Predicated region
    $region6: #{tpu_custom_call.1} parent=1 // pred_check
      _
    $region7: #{tpu_custom_call.1} parent=1 // pred_check_branch
      %14 = sbr.rel (0) target = $region9
    $region8: #{tpu_custom_call.1} parent=1 // pred_region
      _
    $region9: #{tpu_custom_call.1} parent=1 // pred_fallthru
      _
    // Predicated region
    $region10: #{tpu_custom_call.1} parent=1 // pred_check
      _
    $region11: #{tpu_custom_call.1} parent=1 // pred_check_branch
      %16 = sbr.rel (0) target = $region13
    $region12: #{tpu_custom_call.1} parent=1 // pred_region
      _
    $region13: #{tpu_custom_call.1} parent=1 // pred_fallthru
      _
    // Predicated region
    $region14: #{tpu_custom_call.1} parent=1 // pred_check
      _
    $region15: #{tpu_custom_call.1} parent=1 // pred_check_branch
      %18 = sbr.rel (0) target = $region17
    $region16: #{tpu_custom_call.1} parent=1 // pred_region
      _
    $region17: #{tpu_custom_call.1} parent=1 // pred_fallthru
      _
    // Predicated region
    $region18: #{tpu_custom_call.1} parent=1 // pred_check
      _
    $region19: #{tpu_custom_call.1} parent=1 // pred_check_branch
      %20 = sbr.rel (0) target = $region21
    $region20: #{tpu_custom_call.1} parent=1 // pred_region
      _
    $region21: #{tpu_custom_call.1} parent=1 // pred_fallthru
      _
    %v21 = vld [vmem:[%s0] sm:$0xff]
    %v22 = vld [vmem:[%s0 + $0x8] sm:$0xf]
    %v23 = vld [vmem:[%s1] sm:$0xff]
    %v24 = vld [vmem:[%s1 + $0x8] sm:$0xff]
    %v25 = vld [vmem:[%s1 + $0x10] sm:$0xff]
    %v26 = vld [vmem:[%s1 + $0x18] sm:$0xff]
    %v27 = vld [vmem:[%s1 + $0x20] sm:$0xff]
    %v28 = vld [vmem:[%s1 + $0x28] sm:$0xff]
    %v29 = vld [vmem:[%s1 + $0x30] sm:$0xff]
    %v30 = vld [vmem:[%s1 + $0x38] sm:$0xff]
    %v31 = vld [vmem:[%s1 + $0x40] sm:$0xff]
    %v32 = vld [vmem:[%s1 + $0x48] sm:$0xff]
    %v33 = vld [vmem:[%s1 + $0x50] sm:$0xff]
    %v34 = vld [vmem:[%s1 + $0x58] sm:$0xff]
    %v35 = vld [vmem:[%s1 + $0x60] sm:$0xff]
    %v36 = vld [vmem:[%s1 + $0x68] sm:$0xff]
    %v37 = vld [vmem:[%s1 + $0x70] sm:$0xff]
    %v38 = vld [vmem:[%s1 + $0x78] sm:$0xff]
    %v39 = vld [vmem:[%s1 + $0x80] sm:$0xff]
    %v40 = vld [vmem:[%s1 + $0x88] sm:$0xff]
    %v41 = vld [vmem:[%s1 + $0x90] sm:$0xff]
    %v42 = vld [vmem:[%s1 + $0x98] sm:$0xff]
    %v43 = vld [vmem:[%s1 + $0xa0] sm:$0xff]
    %v44 = vld [vmem:[%s1 + $0xa8] sm:$0xff]
    %v45 = vld [vmem:[%s1 + $0xb0] sm:$0xff]
    %v46 = vld [vmem:[%s1 + $0xb8] sm:$0xff]
    %v47 = vld [vmem:[%s1 + $0xc0] sm:$0xff]
    %v48 = vld [vmem:[%s1 + $0xc8] sm:$0xff]
    %v49 = vld [vmem:[%s1 + $0xd0] sm:$0xff]
    %v50 = vld [vmem:[%s1 + $0xd8] sm:$0xff]
    %v51 = vld [vmem:[%s1 + $0xe0] sm:$0xff]
    %v52 = vld [vmem:[%s1 + $0xe8] sm:$0xff]
    %v53 = vld [vmem:[%s1 + $0xf0] sm:$0xff]
    %v54 = vld [vmem:[%s1 + $0xf8] sm:$0xff]
    %v55 = vld [vmem:[%s1 + $0x100] sm:$0xff]
    %v56 = vld [vmem:[%s1 + $0x108] sm:$0xff]
    %v57 = vld [vmem:[%s1 + $0x110] sm:$0xff]
    %v58 = vld [vmem:[%s1 + $0x118] sm:$0xff]
    %v59 = vld [vmem:[%s1 + $0x120] sm:$0xff]
    %v60 = vld [vmem:[%s1 + $0x128] sm:$0xff]
    %v61 = vld [vmem:[%s1 + $0x130] sm:$0xff]
    %v62 = vld [vmem:[%s1 + $0x138] sm:$0xff]
    %v63 = vld [vmem:[%s1 + $0x140] sm:$0xff]
    %v64 = vld [vmem:[%s1 + $0x148] sm:$0xff]
    %v65 = vld [vmem:[%s1 + $0x150] sm:$0xff]
    %v66 = vld [vmem:[%s1 + $0x158] sm:$0xff]
    %v67 = vld [vmem:[%s1 + $0x160] sm:$0xff]
    %v68 = vld [vmem:[%s1 + $0x168] sm:$0xff]
    %v69 = vld [vmem:[%s1 + $0x170] sm:$0xff]
    %v70 = vld [vmem:[%s1 + $0x178] sm:$0xff]
    %v71 = vld [vmem:[%s1 + $0x180] sm:$0xff]
    %v72 = vld [vmem:[%s1 + $0x188] sm:$0xff]
    %v73 = vld [vmem:[%s1 + $0x190] sm:$0xff]
    %v74 = vld [vmem:[%s1 + $0x198] sm:$0xff]
    %v75 = vld [vmem:[%s1 + $0x1a0] sm:$0xff]
    %v76 = vld [vmem:[%s1 + $0x1a8] sm:$0xff]
    %v77 = vld [vmem:[%s1 + $0x1b0] sm:$0xff]
    %v78 = vld [vmem:[%s1 + $0x1b8] sm:$0xff]
    %v79 = vld [vmem:[%s1 + $0x1c0] sm:$0xff]
    %v80 = vld [vmem:[%s1 + $0x1c8] sm:$0xff]
    %v81 = vld [vmem:[%s1 + $0x1d0] sm:$0xff]
    %v82 = vld [vmem:[%s1 + $0x1d8] sm:$0xff]
    %v83 = vld [vmem:[%s1 + $0x1e0] sm:$0xff]
    %v84 = vld [vmem:[%s1 + $0x1e8] sm:$0xff]
    %v85 = vld [vmem:[%s1 + $0x1f0] sm:$0xff]
    %v86 = vld [vmem:[%s1 + $0x1f8] sm:$0xff]
    %v87 = vld [vmem:[%s1 + $0x200] sm:$0xff]
    %v88 = vld [vmem:[%s1 + $0x208] sm:$0xff]
    %v89 = vld [vmem:[%s1 + $0x210] sm:$0xff]
    %v90 = vld [vmem:[%s1 + $0x218] sm:$0xff]
    %v91 = vld [vmem:[%s1 + $0x220] sm:$0xff]
    %v92 = vld [vmem:[%s1 + $0x228] sm:$0xff]
    %v93 = vld [vmem:[%s1 + $0x230] sm:$0xff]
    %v94 = vld [vmem:[%s1 + $0x238] sm:$0xff]
    %v95 = vld [vmem:[%s1 + $0x240] sm:$0xff]
    %v96 = vld [vmem:[%s1 + $0x248] sm:$0xff]
    %v97 = vld [vmem:[%s1 + $0x250] sm:$0xff]
    %v98 = vld [vmem:[%s1 + $0x258] sm:$0xff]
    %v99 = vld [vmem:[%s1 + $0x260] sm:$0xff]
    %v100 = vld [vmem:[%s1 + $0x268] sm:$0xff]
    %v101 = vld [vmem:[%s1 + $0x270] sm:$0xff]
    %v102 = vld [vmem:[%s1 + $0x278] sm:$0xff]
    %v103 = vld [vmem:[%s1 + $0x280] sm:$0xff]
    %v104 = vld [vmem:[%s1 + $0x288] sm:$0xff]
    %v105 = vld [vmem:[%s1 + $0x290] sm:$0xff]
    %v106 = vld [vmem:[%s1 + $0x298] sm:$0xff]
    %v107 = vld [vmem:[%s1 + $0x2a0] sm:$0xff]
    %v108 = vld [vmem:[%s1 + $0x2a8] sm:$0xff]
    %v109 = vld [vmem:[%s1 + $0x2b0] sm:$0xff]
    %v110 = vld [vmem:[%s1 + $0x2b8] sm:$0xff]
    %v111 = vld [vmem:[%s1 + $0x2c0] sm:$0xff]
    %v112 = vld [vmem:[%s1 + $0x2c8] sm:$0xff]
    %v113 = vld [vmem:[%s1 + $0x2d0] sm:$0xff]
    %v114 = vld [vmem:[%s1 + $0x2d8] sm:$0xff]
    %v115 = vld [vmem:[%s1 + $0x2e0] sm:$0xff]
    %v116 = vld [vmem:[%s1 + $0x2e8] sm:$0xff]
    %v117 = vld [vmem:[%s1 + $0x2f0] sm:$0xff]
    %v118 = vld [vmem:[%s1 + $0x2f8] sm:$0xff]
    %v119 = vld [vmem:[%s1 + $0x300] sm:$0xff]
    %v120 = vld [vmem:[%s1 + $0x308] sm:$0xff]
    %v121 = vld [vmem:[%s1 + $0x310] sm:$0xff]
    %v122 = vld [vmem:[%s1 + $0x318] sm:$0xff]
    %v123 = vld [vmem:[%s1 + $0x320] sm:$0xff]
    %v124 = vld [vmem:[%s1 + $0x328] sm:$0xff]
    %v125 = vld [vmem:[%s1 + $0x330] sm:$0xff]
    %v126 = vld [vmem:[%s1 + $0x338] sm:$0xff]
    %v127 = vld [vmem:[%s1 + $0x340] sm:$0xff]
    %v128 = vld [vmem:[%s1 + $0x348] sm:$0xff]
    %v129 = vld [vmem:[%s1 + $0x350] sm:$0xff]
    %v130 = vld [vmem:[%s1 + $0x358] sm:$0xff]
    %v131 = vld [vmem:[%s1 + $0x360] sm:$0xff]
    %v132 = vld [vmem:[%s1 + $0x368] sm:$0xff]
    %v133 = vld [vmem:[%s1 + $0x370] sm:$0xff]
    %v134 = vld [vmem:[%s1 + $0x378] sm:$0xff]
    %v135 = vld [vmem:[%s1 + $0x380] sm:$0xff]
    %v136 = vld [vmem:[%s1 + $0x388] sm:$0xff]
    %v137 = vld [vmem:[%s1 + $0x390] sm:$0xff]
    %v138 = vld [vmem:[%s1 + $0x398] sm:$0xff]
    %v139 = vld [vmem:[%s1 + $0x3a0] sm:$0xff]
    %v140 = vld [vmem:[%s1 + $0x3a8] sm:$0xff]
    %v141 = vld [vmem:[%s1 + $0x3b0] sm:$0xff]
    %v142 = vld [vmem:[%s1 + $0x3b8] sm:$0xff]
    %v143 = vld [vmem:[%s1 + $0x3c0] sm:$0xff]
    %v144 = vld [vmem:[%s1 + $0x3c8] sm:$0xff]
    %v145 = vld [vmem:[%s1 + $0x3d0] sm:$0xff]
    %v146 = vld [vmem:[%s1 + $0x3d8] sm:$0xff]
    %v147 = vld [vmem:[%s1 + $0x3e0] sm:$0xff]
    %v148 = vld [vmem:[%s1 + $0x3e8] sm:$0xff]
    %v149 = vld [vmem:[%s1 + $0x3f0] sm:$0xff]
    %v150 = vld [vmem:[%s1 + $0x3f8] sm:$0xff]
    %v151 = vld [vmem:[%s1 + $0x400] sm:$0xff]
    %v152 = vld [vmem:[%s1 + $0x408] sm:$0xff]
    %v153 = vld [vmem:[%s1 + $0x410] sm:$0xff]
    %v154 = vld [vmem:[%s1 + $0x418] sm:$0xff]
    %v155 = vld [vmem:[%s1 + $0x420] sm:$0xff]
    %v156 = vld [vmem:[%s1 + $0x428] sm:$0xff]
    %v157 = vld [vmem:[%s1 + $0x430] sm:$0xff]
    %v158 = vld [vmem:[%s1 + $0x438] sm:$0xff]
    %v159 = vld [vmem:[%s1 + $0x440] sm:$0xff]
    %v160 = vld [vmem:[%s1 + $0x448] sm:$0xff]
    %v161 = vld [vmem:[%s1 + $0x450] sm:$0xff]
    %v162 = vld [vmem:[%s1 + $0x458] sm:$0xff]
    %v163 = vld [vmem:[%s1 + $0x460] sm:$0xff]
    %v164 = vld [vmem:[%s1 + $0x468] sm:$0xff]
    %v165 = vld [vmem:[%s1 + $0x470] sm:$0xff]
    %v166 = vld [vmem:[%s1 + $0x478] sm:$0xff]
    %v167 = vld [vmem:[%s1 + $0x480] sm:$0xff]
    %v168 = vld [vmem:[%s1 + $0x488] sm:$0xff]
    %v169 = vld [vmem:[%s1 + $0x490] sm:$0xff]
    %v170 = vld [vmem:[%s1 + $0x498] sm:$0xff]
    %v171 = vld [vmem:[%s1 + $0x4a0] sm:$0xff]
    %v172 = vld [vmem:[%s1 + $0x4a8] sm:$0xff]
    %v173 = vld [vmem:[%s1 + $0x4b0] sm:$0xff]
    %v174 = vld [vmem:[%s1 + $0x4b8] sm:$0xff]
    %v175 = vld [vmem:[%s1 + $0x4c0] sm:$0xff]
    %v176 = vld [vmem:[%s1 + $0x4c8] sm:$0xff]
    %v177 = vld [vmem:[%s1 + $0x4d0] sm:$0xff]
    %v178 = vld [vmem:[%s1 + $0x4d8] sm:$0xff]
    %v179 = vld [vmem:[%s1 + $0x4e0] sm:$0xff]
    %v180 = vld [vmem:[%s1 + $0x4e8] sm:$0xff]
    %v181 = vld [vmem:[%s1 + $0x4f0] sm:$0xff]
    %v182 = vld [vmem:[%s1 + $0x4f8] sm:$0xff]
    %v183 = vld [vmem:[%s1 + $0x500] sm:$0xff]
    %v184 = vld [vmem:[%s1 + $0x508] sm:$0xff]
    %v185 = vld [vmem:[%s1 + $0x510] sm:$0xff]
    %v186 = vld [vmem:[%s1 + $0x518] sm:$0xff]
    %v187 = vld [vmem:[%s1 + $0x520] sm:$0xff]
    %v188 = vld [vmem:[%s1 + $0x528] sm:$0xff]
    %v189 = vld [vmem:[%s1 + $0x530] sm:$0xff]
    %v190 = vld [vmem:[%s1 + $0x538] sm:$0xff]
    %v191 = vld [vmem:[%s1 + $0x540] sm:$0xff]
    %v192 = vld [vmem:[%s1 + $0x548] sm:$0xff]
    %v193 = vld [vmem:[%s1 + $0x550] sm:$0xff]
    %v194 = vld [vmem:[%s1 + $0x558] sm:$0xff]
    %v195 = vld [vmem:[%s1 + $0x560] sm:$0xff]
    %v196 = vld [vmem:[%s1 + $0x568] sm:$0xff]
    %v197 = vld [vmem:[%s1 + $0x570] sm:$0xff]
    %v198 = vld [vmem:[%s1 + $0x578] sm:$0xff]
    %v199 = vld [vmem:[%s1 + $0x580] sm:$0xff]
    %v200 = vld [vmem:[%s1 + $0x588] sm:$0xff]
    %v201 = vld [vmem:[%s1 + $0x590] sm:$0xff]
    %v202 = vld [vmem:[%s1 + $0x598] sm:$0xff]
    %v203 = vld [vmem:[%s1 + $0x5a0] sm:$0xff]
    %v204 = vld [vmem:[%s1 + $0x5a8] sm:$0xff]
    %v205 = vld [vmem:[%s1 + $0x5b0] sm:$0xff]
    %v206 = vld [vmem:[%s1 + $0x5b8] sm:$0xff]
    %v207 = vld [vmem:[%s1 + $0x5c0] sm:$0xff]
    %v208 = vld [vmem:[%s1 + $0x5c8] sm:$0xff]
    %v209 = vld [vmem:[%s1 + $0x5d0] sm:$0xff]
    %v210 = vld [vmem:[%s1 + $0x5d8] sm:$0xff]
    %v211 = vld [vmem:[%s1 + $0x5e0] sm:$0xff]
    %v212 = vld [vmem:[%s1 + $0x5e8] sm:$0xff]
    %v213 = vld [vmem:[%s1 + $0x5f0] sm:$0xff]
    %v214 = vld [vmem:[%s1 + $0x5f8] sm:$0xff]
    %v215 = vld [vmem:[%s1 + $0x600] sm:$0xff]
    %v216 = vld [vmem:[%s1 + $0x608] sm:$0xff]
    %v217 = vld [vmem:[%s1 + $0x610] sm:$0xff]
    %v218 = vld [vmem:[%s1 + $0x618] sm:$0xff]
    %v219 = vld [vmem:[%s1 + $0x620] sm:$0xff]
    %v220 = vld [vmem:[%s1 + $0x628] sm:$0xff]
    %v221 = vld [vmem:[%s1 + $0x630] sm:$0xff]
    %v222 = vld [vmem:[%s1 + $0x638] sm:$0xff]
    %v223 = vld [vmem:[%s1 + $0x640] sm:$0xff]
    %v224 = vld [vmem:[%s1 + $0x648] sm:$0xff]
    %v225 = vld [vmem:[%s1 + $0x650] sm:$0xff]
    %v226 = vld [vmem:[%s1 + $0x658] sm:$0xff]
    %v227 = vld [vmem:[%s1 + $0x660] sm:$0xff]
    %v228 = vld [vmem:[%s1 + $0x668] sm:$0xff]
    %v229 = vld [vmem:[%s1 + $0x670] sm:$0xff]
    %v230 = vld [vmem:[%s1 + $0x678] sm:$0xff]
    %v231 = vld [vmem:[%s1 + $0x680] sm:$0xff]
    %v232 = vld [vmem:[%s1 + $0x688] sm:$0xff]
    %v233 = vld [vmem:[%s1 + $0x690] sm:$0xff]
    %v234 = vld [vmem:[%s1 + $0x698] sm:$0xff]
    %v235 = vld [vmem:[%s1 + $0x6a0] sm:$0xff]
    %v236 = vld [vmem:[%s1 + $0x6a8] sm:$0xff]
    %v237 = vld [vmem:[%s1 + $0x6b0] sm:$0xff]
    %v238 = vld [vmem:[%s1 + $0x6b8] sm:$0xff]
    %v239 = vld [vmem:[%s1 + $0x6c0] sm:$0xff]
    %v240 = vld [vmem:[%s1 + $0x6c8] sm:$0xff]
    %v241 = vld [vmem:[%s1 + $0x6d0] sm:$0xff]
    %v242 = vld [vmem:[%s1 + $0x6d8] sm:$0xff]
    %v243 = vld [vmem:[%s1 + $0x6e0] sm:$0xff]
    %v244 = vld [vmem:[%s1 + $0x6e8] sm:$0xff]
    %v245 = vld [vmem:[%s1 + $0x6f0] sm:$0xff]
    %v246 = vld [vmem:[%s1 + $0x6f8] sm:$0xff]
    %v247 = vld [vmem:[%s1 + $0x700] sm:$0xff]
    %v248 = vld [vmem:[%s1 + $0x708] sm:$0xff]
    %v249 = vld [vmem:[%s1 + $0x710] sm:$0xff]
    %v250 = vld [vmem:[%s1 + $0x718] sm:$0xff]
    %v251 = vld [vmem:[%s1 + $0x720] sm:$0xff]
    %v252 = vld [vmem:[%s1 + $0x728] sm:$0xff]
    %v253 = vld [vmem:[%s1 + $0x730] sm:$0xff]
    %v254 = vld [vmem:[%s1 + $0x738] sm:$0xff]
    %v255 = vld [vmem:[%s1 + $0x740] sm:$0xff]
    %v256 = vld [vmem:[%s1 + $0x748] sm:$0xff]
    %v257 = vld [vmem:[%s1 + $0x750] sm:$0xff]
    %v258 = vld [vmem:[%s1 + $0x758] sm:$0xff]
    %v259 = vld [vmem:[%s1 + $0x760] sm:$0xff]
    %v260 = vld [vmem:[%s1 + $0x768] sm:$0xff]
    %v261 = vld [vmem:[%s1 + $0x770] sm:$0xff]
    %v262 = vld [vmem:[%s1 + $0x778] sm:$0xff]
    %v263 = vld [vmem:[%s1 + $0x780] sm:$0xff]
    %v264 = vld [vmem:[%s1 + $0x788] sm:$0xff]
    %v265 = vld [vmem:[%s1 + $0x790] sm:$0xff]
    %v266 = vld [vmem:[%s1 + $0x798] sm:$0xff]
    %v267 = vld [vmem:[%s1 + $0x7a0] sm:$0xff]
    %v268 = vld [vmem:[%s1 + $0x7a8] sm:$0xff]
    %v269 = vld [vmem:[%s1 + $0x7b0] sm:$0xff]
    %v270 = vld [vmem:[%s1 + $0x7b8] sm:$0xff]
    %v271 = vld [vmem:[%s1 + $0x7c0] sm:$0xff]
    %v272 = vld [vmem:[%s1 + $0x7c8] sm:$0xff]
    %v273 = vld [vmem:[%s1 + $0x7d0] sm:$0xff]
    %v274 = vld [vmem:[%s1 + $0x7d8] sm:$0xff]
    %v275 = vld [vmem:[%s1 + $0x7e0] sm:$0xff]
    %v276 = vld [vmem:[%s1 + $0x7e8] sm:$0xff]
    %v277 = vld [vmem:[%s1 + $0x7f0] sm:$0xff]
    %v278 = vld [vmem:[%s1 + $0x7f8] sm:$0xff]
    %v279 = vld [vmem:[%s1 + $0x800] sm:$0xff]
    %v280 = vld [vmem:[%s1 + $0x808] sm:$0xff]
    %v281 = vld [vmem:[%s1 + $0x810] sm:$0xff]
    %v282 = vld [vmem:[%s1 + $0x818] sm:$0xff]
    %v283 = vld [vmem:[%s1 + $0x820] sm:$0xff]
    %v284 = vld [vmem:[%s1 + $0x828] sm:$0xff]
    %v285 = vld [vmem:[%s1 + $0x830] sm:$0xff]
    %v286 = vld [vmem:[%s1 + $0x838] sm:$0xff]
    %v287 = vld [vmem:[%s1 + $0x840] sm:$0xff]
    %v288 = vld [vmem:[%s1 + $0x848] sm:$0xff]
    %v289 = vld [vmem:[%s1 + $0x850] sm:$0xff]
    %v290 = vld [vmem:[%s1 + $0x858] sm:$0xff]
    %v291 = vld [vmem:[%s1 + $0x860] sm:$0xff]
    %v292 = vld [vmem:[%s1 + $0x868] sm:$0xff]
    %v293 = vld [vmem:[%s1 + $0x870] sm:$0xff]
    %v294 = vld [vmem:[%s1 + $0x878] sm:$0xff]
    %v295 = vld [vmem:[%s1 + $0x880] sm:$0xff]
    %v296 = vld [vmem:[%s1 + $0x888] sm:$0xff]
    %v297 = vld [vmem:[%s1 + $0x890] sm:$0xff]
    %v298 = vld [vmem:[%s1 + $0x898] sm:$0xff]
    %v299 = vld [vmem:[%s1 + $0x8a0] sm:$0xff]
    %v300 = vld [vmem:[%s1 + $0x8a8] sm:$0xff]
    %v301 = vld [vmem:[%s1 + $0x8b0] sm:$0xff]
    %v302 = vld [vmem:[%s1 + $0x8b8] sm:$0xff]
    %v303 = vld [vmem:[%s1 + $0x8c0] sm:$0xff]
    %v304 = vld [vmem:[%s1 + $0x8c8] sm:$0xff]
    %v305 = vld [vmem:[%s1 + $0x8d0] sm:$0xff]
    %v306 = vld [vmem:[%s1 + $0x8d8] sm:$0xff]
    %v307 = vld [vmem:[%s1 + $0x8e0] sm:$0xff]
    %v308 = vld [vmem:[%s1 + $0x8e8] sm:$0xff]
    %v309 = vld [vmem:[%s1 + $0x8f0] sm:$0xff]
    %v310 = vld [vmem:[%s1 + $0x8f8] sm:$0xff]
    %v311 = vld [vmem:[%s1 + $0x900] sm:$0xff]
    %v312 = vld [vmem:[%s1 + $0x908] sm:$0xff]
    %v313 = vld [vmem:[%s1 + $0x910] sm:$0xff]
    %v314 = vld [vmem:[%s1 + $0x918] sm:$0xff]
    %v315 = vld [vmem:[%s1 + $0x920] sm:$0xff]
    %v316 = vld [vmem:[%s1 + $0x928] sm:$0xff]
    %v317 = vld [vmem:[%s1 + $0x930] sm:$0xff]
    %v318 = vld [vmem:[%s1 + $0x938] sm:$0xff]
    %v319 = vld [vmem:[%s1 + $0x940] sm:$0xff]
    %v320 = vld [vmem:[%s1 + $0x948] sm:$0xff]
    %v321 = vld [vmem:[%s1 + $0x950] sm:$0xff]
    %v322 = vld [vmem:[%s1 + $0x958] sm:$0xff]
    %v323 = vld [vmem:[%s1 + $0x960] sm:$0xff]
    %v324 = vld [vmem:[%s1 + $0x968] sm:$0xff]
    %v325 = vld [vmem:[%s1 + $0x970] sm:$0xff]
    %v326 = vld [vmem:[%s1 + $0x978] sm:$0xff]
    %v327 = vld [vmem:[%s1 + $0x980] sm:$0xff]
    %v328 = vld [vmem:[%s1 + $0x988] sm:$0xff]
    %v329 = vld [vmem:[%s1 + $0x990] sm:$0xff]
    %v330 = vld [vmem:[%s1 + $0x998] sm:$0xff]
    %v331 = vld [vmem:[%s1 + $0x9a0] sm:$0xff]
    %v332 = vld [vmem:[%s1 + $0x9a8] sm:$0xff]
    %v333 = vld [vmem:[%s1 + $0x9b0] sm:$0xff]
    %v334 = vld [vmem:[%s1 + $0x9b8] sm:$0xff]
    %v335 = vld [vmem:[%s1 + $0x9c0] sm:$0xff]
    %v336 = vld [vmem:[%s1 + $0x9c8] sm:$0xff]
    %v337 = vld [vmem:[%s1 + $0x9d0] sm:$0xff]
    %v338 = vld [vmem:[%s1 + $0x9d8] sm:$0xff]
    %v339 = vld [vmem:[%s1 + $0x9e0] sm:$0xff]
    %v340 = vld [vmem:[%s1 + $0x9e8] sm:$0xff]
    %v341 = vld [vmem:[%s1 + $0x9f0] sm:$0xff]
    %v342 = vld [vmem:[%s1 + $0x9f8] sm:$0xff]
    %v343 = vld [vmem:[%s1 + $0xa00] sm:$0xff]
    %v344 = vld [vmem:[%s1 + $0xa08] sm:$0xff]
    %v345 = vld [vmem:[%s1 + $0xa10] sm:$0xff]
    %v346 = vld [vmem:[%s1 + $0xa18] sm:$0xff]
    %v347 = vld [vmem:[%s1 + $0xa20] sm:$0xff]
    %v348 = vld [vmem:[%s1 + $0xa28] sm:$0xff]
    %v349 = vld [vmem:[%s1 + $0xa30] sm:$0xff]
    %v350 = vld [vmem:[%s1 + $0xa38] sm:$0xff]
    %v351 = vld [vmem:[%s1 + $0xa40] sm:$0xff]
    %v352 = vld [vmem:[%s1 + $0xa48] sm:$0xff]
    %v353 = vld [vmem:[%s1 + $0xa50] sm:$0xff]
    %v354 = vld [vmem:[%s1 + $0xa58] sm:$0xff]
    %v355 = vld [vmem:[%s1 + $0xa60] sm:$0xff]
    %v356 = vld [vmem:[%s1 + $0xa68] sm:$0xff]
    %v357 = vld [vmem:[%s1 + $0xa70] sm:$0xff]
    %v358 = vld [vmem:[%s1 + $0xa78] sm:$0xff]
    %v359 = vld [vmem:[%s1 + $0xa80] sm:$0xff]
    %v360 = vld [vmem:[%s1 + $0xa88] sm:$0xff]
    %v361 = vld [vmem:[%s1 + $0xa90] sm:$0xff]
    %v362 = vld [vmem:[%s1 + $0xa98] sm:$0xff]
    %v363 = vld [vmem:[%s1 + $0xaa0] sm:$0xff]
    %v364 = vld [vmem:[%s1 + $0xaa8] sm:$0xff]
    %v365 = vld [vmem:[%s1 + $0xab0] sm:$0xff]
    %v366 = vld [vmem:[%s1 + $0xab8] sm:$0xff]
    %v367 = vld [vmem:[%s1 + $0xac0] sm:$0xff]
    %v368 = vld [vmem:[%s1 + $0xac8] sm:$0xff]
    %v369 = vld [vmem:[%s1 + $0xad0] sm:$0xff]
    %v370 = vld [vmem:[%s1 + $0xad8] sm:$0xff]
    %v371 = vld [vmem:[%s1 + $0xae0] sm:$0xff]
    %v372 = vld [vmem:[%s1 + $0xae8] sm:$0xff]
    %v373 = vld [vmem:[%s1 + $0xaf0] sm:$0xff]
    %v374 = vld [vmem:[%s1 + $0xaf8] sm:$0xff]
    %v375 = vld [vmem:[%s1 + $0xb00] sm:$0xff]
    %v376 = vld [vmem:[%s1 + $0xb08] sm:$0xff]
    %v377 = vld [vmem:[%s1 + $0xb10] sm:$0xff]
    %v378 = vld [vmem:[%s1 + $0xb18] sm:$0xff]
    %v379 = vld [vmem:[%s1 + $0xb20] sm:$0xff]
    %v380 = vld [vmem:[%s1 + $0xb28] sm:$0xff]
    %v381 = vld [vmem:[%s1 + $0xb30] sm:$0xff]
    %v382 = vld [vmem:[%s1 + $0xb38] sm:$0xff]
    %v383 = vld [vmem:[%s1 + $0xb40] sm:$0xff]
    %v384 = vld [vmem:[%s1 + $0xb48] sm:$0xff]
    %v385 = vld [vmem:[%s1 + $0xb50] sm:$0xff]
    %v386 = vld [vmem:[%s1 + $0xb58] sm:$0xff]
    %v387 = vld [vmem:[%s1 + $0xb60] sm:$0xff]
    %v388 = vld [vmem:[%s1 + $0xb68] sm:$0xff]
    %v389 = vld [vmem:[%s1 + $0xb70] sm:$0xff]
    %v390 = vld [vmem:[%s1 + $0xb78] sm:$0xff]
    %v391 = vld [vmem:[%s1 + $0xb80] sm:$0xff]
    %v392 = vld [vmem:[%s1 + $0xb88] sm:$0xff]
    %v393 = vld [vmem:[%s1 + $0xb90] sm:$0xff]
    %v394 = vld [vmem:[%s1 + $0xb98] sm:$0xff]
    %v395 = vld [vmem:[%s1 + $0xba0] sm:$0xff]
    %v396 = vld [vmem:[%s1 + $0xba8] sm:$0xff]
    %v397 = vld [vmem:[%s1 + $0xbb0] sm:$0xff]
    %v398 = vld [vmem:[%s1 + $0xbb8] sm:$0xff]
    %v399 = vld [vmem:[%s1 + $0xbc0] sm:$0xff]
    %v400 = vld [vmem:[%s1 + $0xbc8] sm:$0xff]
    %v401 = vld [vmem:[%s1 + $0xbd0] sm:$0xff]
    %v402 = vld [vmem:[%s1 + $0xbd8] sm:$0xff]
    %v403 = vld [vmem:[%s1 + $0xbe0] sm:$0xff]
    %v404 = vld [vmem:[%s1 + $0xbe8] sm:$0xff]
    %v405 = vld [vmem:[%s1 + $0xbf0] sm:$0xff]
    %v406 = vld [vmem:[%s1 + $0xbf8] sm:$0xff]
    %v407 = vld [vmem:[%s2] sm:$0xf]
    %v409 = vlaneseq
    %v410 = vshrl.u32 %v409, 7
    %v411 = vsub.s32 0, %v410
    %v412 = vrot.slane %v407, %v411
    %v413 = vlaneseq
    %v414 = vshrl.u32 %v413, 7
    %v415 = vsub.s32 1, %v414
    %v416 = vrot.slane %v407, %v415
    %v417 = vlaneseq
    %v418 = vshrl.u32 %v417, 7
    %v419 = vsub.s32 2, %v418
    %v420 = vrot.slane %v407, %v419
    %v421 = vlaneseq
    %v422 = vshrl.u32 %v421, 7
    %v423 = vsub.s32 3, %v422
    %v424 = vrot.slane %v407, %v423
    %v431 = vcombine.high %v21, %v21
    %v433 = vunpack.c.l.s4 1983009808
    %v434 = vunpack.c.0.s8 %v433
    %v435 = vlaneseq
    %v436 = vshrl.u32 %v435, 7
    %v437 = vsub.s32 %v434, %v436
    %v438 = vrot.slane %v21, %v437
    %v440 = vunpack.c.l.s4 1983009808
    %v441 = vunpack.c.0.s8 %v440
    %v442 = vlaneseq
    %v443 = vshrl.u32 %v442, 7
    %v444 = vsub.s32 %v441, %v443
    %v445 = vrot.slane %v431, %v444
    %v446 = vcombine.high %v438, %v438
    %v447 = vcombine.high %v445, %v445
    %v449 = vunpack.c.l.s4 1983009808
    %v450 = vunpack.c.0.s8 %v449
    %v451 = vlaneseq
    %v452 = vshrl.u32 %v451, 7
    %v453 = vsub.s32 %v450, %v452
    %v454 = vrot.slane %v22, %v453
    %v455 = vcombine.high %v454, %v454
    %462 = vmatprep.subr.mxu0 %v24
    %463 = vmatpush1.msra.mxu0 %v23
    %464 = vmatprep.subr.mxu0 %v28
    %465 = vmatpush1.msra.mxu0 %v27
    %466 = vmatprep.subr.mxu0 %v32
    %467 = vmatpush1.msra.mxu0 %v31
    %468 = vmatprep.subr.mxu0 %v36
    %469 = vmatpush1.msra.mxu0 %v35
    %470 = vmatprep.subr.mxu0 %v40
    %471 = vmatpush1.msra.mxu0 %v39
    %472 = vmatprep.subr.mxu0 %v44
    %473 = vmatpush1.msra.mxu0 %v43
    %474 = vmatprep.subr.mxu0 %v48
    %475 = vmatpush1.msra.mxu0 %v47
    %476 = vmatprep.subr.mxu0 %v52
    %477 = vmatpush1.msra.mxu0 %v51
    %478 = vmatprep.subr.mxu0 %v56
    %479 = vmatpush1.msra.mxu0 %v55
    %480 = vmatprep.subr.mxu0 %v60
    %481 = vmatpush1.msra.mxu0 %v59
    %482 = vmatprep.subr.mxu0 %v64
    %483 = vmatpush1.msra.mxu0 %v63
    %484 = vmatprep.subr.mxu0 %v68
    %485 = vmatpush1.msra.mxu0 %v67
    %486 = vmatprep.subr.mxu0 %v72
    %487 = vmatpush1.msra.mxu0 %v71
    %488 = vmatprep.subr.mxu0 %v76
    %489 = vmatpush1.msra.mxu0 %v75
    %490 = vmatprep.subr.mxu0 %v80
    %491 = vmatpush1.msra.mxu0 %v79
    %492 = vmatprep.subr.mxu0 %v84
    %493 = vmatpush1.msra.mxu0 %v83
    %494 = vmatprep.subr.mxu0 %v88
    %495 = vmatpush1.msra.mxu0 %v87
    %496 = vmatprep.subr.mxu0 %v92
    %497 = vmatpush1.msra.mxu0 %v91
    %498 = vmatprep.subr.mxu0 %v96
    %499 = vmatpush1.msra.mxu0 %v95
    %500 = vmatprep.subr.mxu0 %v100
    %501 = vmatpush1.msra.mxu0 %v99
    %502 = vmatprep.subr.mxu0 %v104
    %503 = vmatpush1.msra.mxu0 %v103
    %504 = vmatprep.subr.mxu0 %v108
    %505 = vmatpush1.msra.mxu0 %v107
    %506 = vmatprep.subr.mxu0 %v112
    %507 = vmatpush1.msra.mxu0 %v111
    %508 = vmatprep.subr.mxu0 %v116
    %509 = vmatpush1.msra.mxu0 %v115
    %510 = vmatprep.subr.mxu0 %v120
    %511 = vmatpush1.msra.mxu0 %v119
    %512 = vmatprep.subr.mxu0 %v124
    %513 = vmatpush1.msra.mxu0 %v123
    %514 = vmatprep.subr.mxu0 %v128
    %515 = vmatpush1.msra.mxu0 %v127
    %516 = vmatprep.subr.mxu0 %v132
    %517 = vmatpush1.msra.mxu0 %v131
    %518 = vmatprep.subr.mxu0 %v136
    %519 = vmatpush1.msra.mxu0 %v135
    %520 = vmatprep.subr.mxu0 %v140
    %521 = vmatpush1.msra.mxu0 %v139
    %522 = vmatprep.subr.mxu0 %v144
    %523 = vmatpush1.msra.mxu0 %v143
    %524 = vmatprep.subr.mxu0 %v148
    %525 = vmatpush1.msra.mxu0 %v147
    %526 = vmatprep.mubr.f32.mxu0 %v446
    %527 = vmatmul.mubr.f32.gmra.mrb[0].mxu0 %v438
    %v528 = vpop.f32.mrb[0].mxu0
    %v529 = vadd.f32 %v412, %v528
    %v530 = vpop.f32.mrb[0].mxu0
    %v531 = vadd.f32 %v416, %v530
    %532 = vdwg.mxu0
    %533 = vmatprep.subr.mxu0 %v152
    %534 = vmatpush1.msra.mxu0 %v151
    %535 = vmatprep.subr.mxu0 %v156
    %536 = vmatpush1.msra.mxu0 %v155
    %537 = vmatprep.subr.mxu0 %v160
    %538 = vmatpush1.msra.mxu0 %v159
    %539 = vmatprep.subr.mxu0 %v164
    %540 = vmatpush1.msra.mxu0 %v163
    %541 = vmatprep.subr.mxu0 %v168
    %542 = vmatpush1.msra.mxu0 %v167
    %543 = vmatprep.subr.mxu0 %v172
    %544 = vmatpush1.msra.mxu0 %v171
    %545 = vmatprep.subr.mxu0 %v176
    %546 = vmatpush1.msra.mxu0 %v175
    %547 = vmatprep.subr.mxu0 %v180
    %548 = vmatpush1.msra.mxu0 %v179
    %549 = vmatprep.subr.mxu0 %v184
    %550 = vmatpush1.msra.mxu0 %v183
    %551 = vmatprep.subr.mxu0 %v188
    %552 = vmatpush1.msra.mxu0 %v187
    %553 = vmatprep.subr.mxu0 %v192
    %554 = vmatpush1.msra.mxu0 %v191
    %555 = vmatprep.subr.mxu0 %v196
    %556 = vmatpush1.msra.mxu0 %v195
    %557 = vmatprep.subr.mxu0 %v200
    %558 = vmatpush1.msra.mxu0 %v199
    %559 = vmatprep.subr.mxu0 %v204
    %560 = vmatpush1.msra.mxu0 %v203
    %561 = vmatprep.subr.mxu0 %v208
    %562 = vmatpush1.msra.mxu0 %v207
    %563 = vmatprep.subr.mxu0 %v212
    %564 = vmatpush1.msra.mxu0 %v211
    %565 = vmatprep.subr.mxu0 %v216
    %566 = vmatpush1.msra.mxu0 %v215
    %567 = vmatprep.subr.mxu0 %v220
    %568 = vmatpush1.msra.mxu0 %v219
    %569 = vmatprep.subr.mxu0 %v224
    %570 = vmatpush1.msra.mxu0 %v223
    %571 = vmatprep.subr.mxu0 %v228
    %572 = vmatpush1.msra.mxu0 %v227
    %573 = vmatprep.subr.mxu0 %v232
    %574 = vmatpush1.msra.mxu0 %v231
    %575 = vmatprep.subr.mxu0 %v236
    %576 = vmatpush1.msra.mxu0 %v235
    %577 = vmatprep.subr.mxu0 %v240
    %578 = vmatpush1.msra.mxu0 %v239
    %579 = vmatprep.subr.mxu0 %v244
    %580 = vmatpush1.msra.mxu0 %v243
    %581 = vmatprep.subr.mxu0 %v248
    %582 = vmatpush1.msra.mxu0 %v247
    %583 = vmatprep.subr.mxu0 %v252
    %584 = vmatpush1.msra.mxu0 %v251
    %585 = vmatprep.subr.mxu0 %v256
    %586 = vmatpush1.msra.mxu0 %v255
    %587 = vmatprep.subr.mxu0 %v260
    %588 = vmatpush1.msra.mxu0 %v259
    %589 = vmatprep.subr.mxu0 %v264
    %590 = vmatpush1.msra.mxu0 %v263
    %591 = vmatprep.subr.mxu0 %v268
    %592 = vmatpush1.msra.mxu0 %v267
    %593 = vmatprep.subr.mxu0 %v272
    %594 = vmatpush1.msra.mxu0 %v271
    %595 = vmatprep.subr.mxu0 %v276
    %596 = vmatpush1.msra.mxu0 %v275
    %597 = vmatprep.mubr.f32.mxu0 %v447
    %598 = vmatmul.mubr.f32.gmra.mrb[0].mxu0 %v445
    %v599 = vpop.f32.mrb[0].mxu0
    %v600 = vadd.f32 %v529, %v599
    %v601 = vpop.f32.mrb[0].mxu0
    %v602 = vadd.f32 %v531, %v601
    %603 = vdwg.mxu0
    %604 = vmatprep.subr.mxu0 %v280
    %605 = vmatpush1.msra.mxu0 %v279
    %606 = vmatprep.subr.mxu0 %v284
    %607 = vmatpush1.msra.mxu0 %v283
    %608 = vmatprep.subr.mxu0 %v288
    %609 = vmatpush1.msra.mxu0 %v287
    %610 = vmatprep.subr.mxu0 %v292
    %611 = vmatpush1.msra.mxu0 %v291
    %612 = vmatprep.subr.mxu0 %v296
    %613 = vmatpush1.msra.mxu0 %v295
    %614 = vmatprep.subr.mxu0 %v300
    %615 = vmatpush1.msra.mxu0 %v299
    %616 = vmatprep.subr.mxu0 %v304
    %617 = vmatpush1.msra.mxu0 %v303
    %618 = vmatprep.subr.mxu0 %v308
    %619 = vmatpush1.msra.mxu0 %v307
    %620 = vmatprep.subr.mxu0 %v312
    %621 = vmatpush1.msra.mxu0 %v311
    %622 = vmatprep.subr.mxu0 %v316
    %623 = vmatpush1.msra.mxu0 %v315
    %624 = vmatprep.subr.mxu0 %v320
    %625 = vmatpush1.msra.mxu0 %v319
    %626 = vmatprep.subr.mxu0 %v324
    %627 = vmatpush1.msra.mxu0 %v323
    %628 = vmatprep.subr.mxu0 %v328
    %629 = vmatpush1.msra.mxu0 %v327
    %630 = vmatprep.subr.mxu0 %v332
    %631 = vmatpush1.msra.mxu0 %v331
    %632 = vmatprep.subr.mxu0 %v336
    %633 = vmatpush1.msra.mxu0 %v335
    %634 = vmatprep.subr.mxu0 %v340
    %635 = vmatpush1.msra.mxu0 %v339
    %636 = vmatprep.subr.mxu0 %v344
    %637 = vmatpush1.msra.mxu0 %v343
    %638 = vmatprep.subr.mxu0 %v348
    %639 = vmatpush1.msra.mxu0 %v347
    %640 = vmatprep.subr.mxu0 %v352
    %641 = vmatpush1.msra.mxu0 %v351
    %642 = vmatprep.subr.mxu0 %v356
    %643 = vmatpush1.msra.mxu0 %v355
    %644 = vmatprep.subr.mxu0 %v360
    %645 = vmatpush1.msra.mxu0 %v359
    %646 = vmatprep.subr.mxu0 %v364
    %647 = vmatpush1.msra.mxu0 %v363
    %648 = vmatprep.subr.mxu0 %v368
    %649 = vmatpush1.msra.mxu0 %v367
    %650 = vmatprep.subr.mxu0 %v372
    %651 = vmatpush1.msra.mxu0 %v371
    %652 = vmatprep.subr.mxu0 %v376
    %653 = vmatpush1.msra.mxu0 %v375
    %654 = vmatprep.subr.mxu0 %v380
    %655 = vmatpush1.msra.mxu0 %v379
    %656 = vmatprep.subr.mxu0 %v384
    %657 = vmatpush1.msra.mxu0 %v383
    %658 = vmatprep.subr.mxu0 %v388
    %659 = vmatpush1.msra.mxu0 %v387
    %660 = vmatprep.subr.mxu0 %v392
    %661 = vmatpush1.msra.mxu0 %v391
    %662 = vmatprep.subr.mxu0 %v396
    %663 = vmatpush1.msra.mxu0 %v395
    %664 = vmatprep.subr.mxu0 %v400
    %665 = vmatpush1.msra.mxu0 %v399
    %666 = vmatprep.subr.mxu0 %v404
    %667 = vmatpush1.msra.mxu0 %v403
    %668 = vmatprep.mubr.f32.mxu0 %v455
    %669 = vmatmul.mubr.f32.gmra.mrb[0].mxu0 %v454
    %v670 = vpop.f32.mrb[0].mxu0
    %v671 = vadd.f32 %v600, %v670
    %v672 = vpop.f32.mrb[0].mxu0
    %v673 = vadd.f32 %v602, %v672
    %674 = vdwg.mxu0
    %675 = vmatprep.subr.mxu0 %v26
    %676 = vmatpush1.msra.mxu0 %v25
    %677 = vmatprep.subr.mxu0 %v30
    %678 = vmatpush1.msra.mxu0 %v29
    %679 = vmatprep.subr.mxu0 %v34
    %680 = vmatpush1.msra.mxu0 %v33
    %681 = vmatprep.subr.mxu0 %v38
    %682 = vmatpush1.msra.mxu0 %v37
    %683 = vmatprep.subr.mxu0 %v42
    %684 = vmatpush1.msra.mxu0 %v41
    %685 = vmatprep.subr.mxu0 %v46
    %686 = vmatpush1.msra.mxu0 %v45
    %687 = vmatprep.subr.mxu0 %v50
    %688 = vmatpush1.msra.mxu0 %v49
    %689 = vmatprep.subr.mxu0 %v54
    %690 = vmatpush1.msra.mxu0 %v53
    %691 = vmatprep.subr.mxu0 %v58
    %692 = vmatpush1.msra.mxu0 %v57
    %693 = vmatprep.subr.mxu0 %v62
    %694 = vmatpush1.msra.mxu0 %v61
    %695 = vmatprep.subr.mxu0 %v66
    %696 = vmatpush1.msra.mxu0 %v65
    %697 = vmatprep.subr.mxu0 %v70
    %698 = vmatpush1.msra.mxu0 %v69
    %699 = vmatprep.subr.mxu0 %v74
    %700 = vmatpush1.msra.mxu0 %v73
    %701 = vmatprep.subr.mxu0 %v78
    %702 = vmatpush1.msra.mxu0 %v77
    %703 = vmatprep.subr.mxu0 %v82
    %704 = vmatpush1.msra.mxu0 %v81
    %705 = vmatprep.subr.mxu0 %v86
    %706 = vmatpush1.msra.mxu0 %v85
    %707 = vmatprep.subr.mxu0 %v90
    %708 = vmatpush1.msra.mxu0 %v89
    %709 = vmatprep.subr.mxu0 %v94
    %710 = vmatpush1.msra.mxu0 %v93
    %711 = vmatprep.subr.mxu0 %v98
    %712 = vmatpush1.msra.mxu0 %v97
    %713 = vmatprep.subr.mxu0 %v102
    %714 = vmatpush1.msra.mxu0 %v101
    %715 = vmatprep.subr.mxu0 %v106
    %716 = vmatpush1.msra.mxu0 %v105
    %717 = vmatprep.subr.mxu0 %v110
    %718 = vmatpush1.msra.mxu0 %v109
    %719 = vmatprep.subr.mxu0 %v114
    %720 = vmatpush1.msra.mxu0 %v113
    %721 = vmatprep.subr.mxu0 %v118
    %722 = vmatpush1.msra.mxu0 %v117
    %723 = vmatprep.subr.mxu0 %v122
    %724 = vmatpush1.msra.mxu0 %v121
    %725 = vmatprep.subr.mxu0 %v126
    %726 = vmatpush1.msra.mxu0 %v125
    %727 = vmatprep.subr.mxu0 %v130
    %728 = vmatpush1.msra.mxu0 %v129
    %729 = vmatprep.subr.mxu0 %v134
    %730 = vmatpush1.msra.mxu0 %v133
    %731 = vmatprep.subr.mxu0 %v138
    %732 = vmatpush1.msra.mxu0 %v137
    %733 = vmatprep.subr.mxu0 %v142
    %734 = vmatpush1.msra.mxu0 %v141
    %735 = vmatprep.subr.mxu0 %v146
    %736 = vmatpush1.msra.mxu0 %v145
    %737 = vmatprep.subr.mxu0 %v150
    %738 = vmatpush1.msra.mxu0 %v149
    %739 = vmatprep.mubr.f32.mxu0 %v446
    %740 = vmatmul.mubr.f32.gmra.mrb[0].mxu0 %v438
    %v741 = vpop.f32.mrb[0].mxu0
    %v742 = vadd.f32 %v420, %v741
    %v743 = vpop.f32.mrb[0].mxu0
    %v744 = vadd.f32 %v424, %v743
    %745 = vdwg.mxu0
    %746 = vmatprep.subr.mxu0 %v154
    %747 = vmatpush1.msra.mxu0 %v153
    %748 = vmatprep.subr.mxu0 %v158
    %749 = vmatpush1.msra.mxu0 %v157
    %750 = vmatprep.subr.mxu0 %v162
    %751 = vmatpush1.msra.mxu0 %v161
    %752 = vmatprep.subr.mxu0 %v166
    %753 = vmatpush1.msra.mxu0 %v165
    %754 = vmatprep.subr.mxu0 %v170
    %755 = vmatpush1.msra.mxu0 %v169
    %756 = vmatprep.subr.mxu0 %v174
    %757 = vmatpush1.msra.mxu0 %v173
    %758 = vmatprep.subr.mxu0 %v178
    %759 = vmatpush1.msra.mxu0 %v177
    %760 = vmatprep.subr.mxu0 %v182
    %761 = vmatpush1.msra.mxu0 %v181
    %762 = vmatprep.subr.mxu0 %v186
    %763 = vmatpush1.msra.mxu0 %v185
    %764 = vmatprep.subr.mxu0 %v190
    %765 = vmatpush1.msra.mxu0 %v189
    %766 = vmatprep.subr.mxu0 %v194
    %767 = vmatpush1.msra.mxu0 %v193
    %768 = vmatprep.subr.mxu0 %v198
    %769 = vmatpush1.msra.mxu0 %v197
    %770 = vmatprep.subr.mxu0 %v202
    %771 = vmatpush1.msra.mxu0 %v201
    %772 = vmatprep.subr.mxu0 %v206
    %773 = vmatpush1.msra.mxu0 %v205
    %774 = vmatprep.subr.mxu0 %v210
    %775 = vmatpush1.msra.mxu0 %v209
    %776 = vmatprep.subr.mxu0 %v214
    %777 = vmatpush1.msra.mxu0 %v213
    %778 = vmatprep.subr.mxu0 %v218
    %779 = vmatpush1.msra.mxu0 %v217
    %780 = vmatprep.subr.mxu0 %v222
    %781 = vmatpush1.msra.mxu0 %v221
    %782 = vmatprep.subr.mxu0 %v226
    %783 = vmatpush1.msra.mxu0 %v225
    %784 = vmatprep.subr.mxu0 %v230
    %785 = vmatpush1.msra.mxu0 %v229
    %786 = vmatprep.subr.mxu0 %v234
    %787 = vmatpush1.msra.mxu0 %v233
    %788 = vmatprep.subr.mxu0 %v238
    %789 = vmatpush1.msra.mxu0 %v237
    %790 = vmatprep.subr.mxu0 %v242
    %791 = vmatpush1.msra.mxu0 %v241
    %792 = vmatprep.subr.mxu0 %v246
    %793 = vmatpush1.msra.mxu0 %v245
    %794 = vmatprep.subr.mxu0 %v250
    %795 = vmatpush1.msra.mxu0 %v249
    %796 = vmatprep.subr.mxu0 %v254
    %797 = vmatpush1.msra.mxu0 %v253
    %798 = vmatprep.subr.mxu0 %v258
    %799 = vmatpush1.msra.mxu0 %v257
    %800 = vmatprep.subr.mxu0 %v262
    %801 = vmatpush1.msra.mxu0 %v261
    %802 = vmatprep.subr.mxu0 %v266
    %803 = vmatpush1.msra.mxu0 %v265
    %804 = vmatprep.subr.mxu0 %v270
    %805 = vmatpush1.msra.mxu0 %v269
    %806 = vmatprep.subr.mxu0 %v274
    %807 = vmatpush1.msra.mxu0 %v273
    %808 = vmatprep.subr.mxu0 %v278
    %809 = vmatpush1.msra.mxu0 %v277
    %810 = vmatprep.mubr.f32.mxu0 %v447
    %811 = vmatmul.mubr.f32.gmra.mrb[0].mxu0 %v445
    %v812 = vpop.f32.mrb[0].mxu0
    %v813 = vadd.f32 %v742, %v812
    %v814 = vpop.f32.mrb[0].mxu0
    %v815 = vadd.f32 %v744, %v814
    %816 = vdwg.mxu0
    %817 = vmatprep.subr.mxu0 %v282
    %818 = vmatpush1.msra.mxu0 %v281
    %819 = vmatprep.subr.mxu0 %v286
    %820 = vmatpush1.msra.mxu0 %v285
    %821 = vmatprep.subr.mxu0 %v290
    %822 = vmatpush1.msra.mxu0 %v289
    %823 = vmatprep.subr.mxu0 %v294
    %824 = vmatpush1.msra.mxu0 %v293
    %825 = vmatprep.subr.mxu0 %v298
    %826 = vmatpush1.msra.mxu0 %v297
    %827 = vmatprep.subr.mxu0 %v302
    %828 = vmatpush1.msra.mxu0 %v301
    %829 = vmatprep.subr.mxu0 %v306
    %830 = vmatpush1.msra.mxu0 %v305
    %831 = vmatprep.subr.mxu0 %v310
    %832 = vmatpush1.msra.mxu0 %v309
    %833 = vmatprep.subr.mxu0 %v314
    %834 = vmatpush1.msra.mxu0 %v313
    %835 = vmatprep.subr.mxu0 %v318
    %836 = vmatpush1.msra.mxu0 %v317
    %837 = vmatprep.subr.mxu0 %v322
    %838 = vmatpush1.msra.mxu0 %v321
    %839 = vmatprep.subr.mxu0 %v326
    %840 = vmatpush1.msra.mxu0 %v325
    %841 = vmatprep.subr.mxu0 %v330
    %842 = vmatpush1.msra.mxu0 %v329
    %843 = vmatprep.subr.mxu0 %v334
    %844 = vmatpush1.msra.mxu0 %v333
    %845 = vmatprep.subr.mxu0 %v338
    %846 = vmatpush1.msra.mxu0 %v337
    %847 = vmatprep.subr.mxu0 %v342
    %848 = vmatpush1.msra.mxu0 %v341
    %849 = vmatprep.subr.mxu0 %v346
    %850 = vmatpush1.msra.mxu0 %v345
    %851 = vmatprep.subr.mxu0 %v350
    %852 = vmatpush1.msra.mxu0 %v349
    %853 = vmatprep.subr.mxu0 %v354
    %854 = vmatpush1.msra.mxu0 %v353
    %855 = vmatprep.subr.mxu0 %v358
    %856 = vmatpush1.msra.mxu0 %v357
    %857 = vmatprep.subr.mxu0 %v362
    %858 = vmatpush1.msra.mxu0 %v361
    %859 = vmatprep.subr.mxu0 %v366
    %860 = vmatpush1.msra.mxu0 %v365
    %861 = vmatprep.subr.mxu0 %v370
    %862 = vmatpush1.msra.mxu0 %v369
    %863 = vmatprep.subr.mxu0 %v374
    %864 = vmatpush1.msra.mxu0 %v373
    %865 = vmatprep.subr.mxu0 %v378
    %866 = vmatpush1.msra.mxu0 %v377
    %867 = vmatprep.subr.mxu0 %v382
    %868 = vmatpush1.msra.mxu0 %v381
    %869 = vmatprep.subr.mxu0 %v386
    %870 = vmatpush1.msra.mxu0 %v385
    %871 = vmatprep.subr.mxu0 %v390
    %872 = vmatpush1.msra.mxu0 %v389
    %873 = vmatprep.subr.mxu0 %v394
    %874 = vmatpush1.msra.mxu0 %v393
    %875 = vmatprep.subr.mxu0 %v398
    %876 = vmatpush1.msra.mxu0 %v397
    %877 = vmatprep.subr.mxu0 %v402
    %878 = vmatpush1.msra.mxu0 %v401
    %879 = vmatprep.subr.mxu0 %v406
    %880 = vmatpush1.msra.mxu0 %v405
    %881 = vmatprep.mubr.f32.mxu0 %v455
    %882 = vmatmul.mubr.f32.gmra.mrb[0].mxu0 %v454
    %v883 = vpop.f32.mrb[0].mxu0
    %v884 = vadd.f32 %v813, %v883
    %v885 = vpop.f32.mrb[0].mxu0
    %v886 = vadd.f32 %v815, %v885
    %887 = vdwg.mxu0
    %v888 = vmax.f32 %v671, 0.0
    %v889 = vmax.f32 %v673, 0.0
    %v890 = vmax.f32 %v884, 0.0
    %v891 = vmax.f32 %v886, 0.0
    %v892 = vld [vmem:[%s3] sm:$0xff]
    %v893 = vld [vmem:[%s3 + $0x8] sm:$0xff]
    %v894 = vld [vmem:[%s3 + $0x10] sm:$0xff]
    %v895 = vld [vmem:[%s3 + $0x18] sm:$0xff]
    %v896 = vld [vmem:[%s3 + $0x20] sm:$0xff]
    %v897 = vld [vmem:[%s3 + $0x28] sm:$0xff]
    %v898 = vld [vmem:[%s3 + $0x30] sm:$0xff]
    %v899 = vld [vmem:[%s3 + $0x38] sm:$0xff]
    %v900 = vld [vmem:[%s3 + $0x40] sm:$0xff]
    %v901 = vld [vmem:[%s3 + $0x48] sm:$0xff]
    %v902 = vld [vmem:[%s3 + $0x50] sm:$0xff]
    %v903 = vld [vmem:[%s3 + $0x58] sm:$0xff]
    %v904 = vld [vmem:[%s3 + $0x60] sm:$0xff]
    %v905 = vld [vmem:[%s3 + $0x68] sm:$0xff]
    %v906 = vld [vmem:[%s3 + $0x70] sm:$0xff]
    %v907 = vld [vmem:[%s3 + $0x78] sm:$0xff]
    %v908 = vld [vmem:[%s3 + $0x80] sm:$0xff]
    %v909 = vld [vmem:[%s3 + $0x88] sm:$0xff]
    %v910 = vld [vmem:[%s3 + $0x90] sm:$0xff]
    %v911 = vld [vmem:[%s3 + $0x98] sm:$0xff]
    %v912 = vld [vmem:[%s3 + $0xa0] sm:$0xff]
    %v913 = vld [vmem:[%s3 + $0xa8] sm:$0xff]
    %v914 = vld [vmem:[%s3 + $0xb0] sm:$0xff]
    %v915 = vld [vmem:[%s3 + $0xb8] sm:$0xff]
    %v916 = vld [vmem:[%s3 + $0xc0] sm:$0xff]
    %v917 = vld [vmem:[%s3 + $0xc8] sm:$0xff]
    %v918 = vld [vmem:[%s3 + $0xd0] sm:$0xff]
    %v919 = vld [vmem:[%s3 + $0xd8] sm:$0xff]
    %v920 = vld [vmem:[%s3 + $0xe0] sm:$0xff]
    %v921 = vld [vmem:[%s3 + $0xe8] sm:$0xff]
    %v922 = vld [vmem:[%s3 + $0xf0] sm:$0xff]
    %v923 = vld [vmem:[%s3 + $0xf8] sm:$0xff]
    %v924 = vld [vmem:[%s3 + $0x100] sm:$0xff]
    %v925 = vld [vmem:[%s3 + $0x108] sm:$0xff]
    %v926 = vld [vmem:[%s3 + $0x110] sm:$0xff]
    %v927 = vld [vmem:[%s3 + $0x118] sm:$0xff]
    %v928 = vld [vmem:[%s3 + $0x120] sm:$0xff]
    %v929 = vld [vmem:[%s3 + $0x128] sm:$0xff]
    %v930 = vld [vmem:[%s3 + $0x130] sm:$0xff]
    %v931 = vld [vmem:[%s3 + $0x138] sm:$0xff]
    %v932 = vld [vmem:[%s3 + $0x140] sm:$0xff]
    %v933 = vld [vmem:[%s3 + $0x148] sm:$0xff]
    %v934 = vld [vmem:[%s3 + $0x150] sm:$0xff]
    %v935 = vld [vmem:[%s3 + $0x158] sm:$0xff]
    %v936 = vld [vmem:[%s3 + $0x160] sm:$0xff]
    %v937 = vld [vmem:[%s3 + $0x168] sm:$0xff]
    %v938 = vld [vmem:[%s3 + $0x170] sm:$0xff]
    %v939 = vld [vmem:[%s3 + $0x178] sm:$0xff]
    %v940 = vld [vmem:[%s3 + $0x180] sm:$0xff]
    %v941 = vld [vmem:[%s3 + $0x188] sm:$0xff]
    %v942 = vld [vmem:[%s3 + $0x190] sm:$0xff]
    %v943 = vld [vmem:[%s3 + $0x198] sm:$0xff]
    %v944 = vld [vmem:[%s3 + $0x1a0] sm:$0xff]
    %v945 = vld [vmem:[%s3 + $0x1a8] sm:$0xff]
    %v946 = vld [vmem:[%s3 + $0x1b0] sm:$0xff]
    %v947 = vld [vmem:[%s3 + $0x1b8] sm:$0xff]
    %v948 = vld [vmem:[%s3 + $0x1c0] sm:$0xff]
    %v949 = vld [vmem:[%s3 + $0x1c8] sm:$0xff]
    %v950 = vld [vmem:[%s3 + $0x1d0] sm:$0xff]
    %v951 = vld [vmem:[%s3 + $0x1d8] sm:$0xff]
    %v952 = vld [vmem:[%s3 + $0x1e0] sm:$0xff]
    %v953 = vld [vmem:[%s3 + $0x1e8] sm:$0xff]
    %v954 = vld [vmem:[%s3 + $0x1f0] sm:$0xff]
    %v955 = vld [vmem:[%s3 + $0x1f8] sm:$0xff]
    %v956 = vld [vmem:[%s3 + $0x200] sm:$0xff]
    %v957 = vld [vmem:[%s3 + $0x208] sm:$0xff]
    %v958 = vld [vmem:[%s3 + $0x210] sm:$0xff]
    %v959 = vld [vmem:[%s3 + $0x218] sm:$0xff]
    %v960 = vld [vmem:[%s3 + $0x220] sm:$0xff]
    %v961 = vld [vmem:[%s3 + $0x228] sm:$0xff]
    %v962 = vld [vmem:[%s3 + $0x230] sm:$0xff]
    %v963 = vld [vmem:[%s3 + $0x238] sm:$0xff]
    %v964 = vld [vmem:[%s3 + $0x240] sm:$0xff]
    %v965 = vld [vmem:[%s3 + $0x248] sm:$0xff]
    %v966 = vld [vmem:[%s3 + $0x250] sm:$0xff]
    %v967 = vld [vmem:[%s3 + $0x258] sm:$0xff]
    %v968 = vld [vmem:[%s3 + $0x260] sm:$0xff]
    %v969 = vld [vmem:[%s3 + $0x268] sm:$0xff]
    %v970 = vld [vmem:[%s3 + $0x270] sm:$0xff]
    %v971 = vld [vmem:[%s3 + $0x278] sm:$0xff]
    %v972 = vld [vmem:[%s3 + $0x280] sm:$0xff]
    %v973 = vld [vmem:[%s3 + $0x288] sm:$0xff]
    %v974 = vld [vmem:[%s3 + $0x290] sm:$0xff]
    %v975 = vld [vmem:[%s3 + $0x298] sm:$0xff]
    %v976 = vld [vmem:[%s3 + $0x2a0] sm:$0xff]
    %v977 = vld [vmem:[%s3 + $0x2a8] sm:$0xff]
    %v978 = vld [vmem:[%s3 + $0x2b0] sm:$0xff]
    %v979 = vld [vmem:[%s3 + $0x2b8] sm:$0xff]
    %v980 = vld [vmem:[%s3 + $0x2c0] sm:$0xff]
    %v981 = vld [vmem:[%s3 + $0x2c8] sm:$0xff]
    %v982 = vld [vmem:[%s3 + $0x2d0] sm:$0xff]
    %v983 = vld [vmem:[%s3 + $0x2d8] sm:$0xff]
    %v984 = vld [vmem:[%s3 + $0x2e0] sm:$0xff]
    %v985 = vld [vmem:[%s3 + $0x2e8] sm:$0xff]
    %v986 = vld [vmem:[%s3 + $0x2f0] sm:$0xff]
    %v987 = vld [vmem:[%s3 + $0x2f8] sm:$0xff]
    %v988 = vld [vmem:[%s3 + $0x300] sm:$0xff]
    %v989 = vld [vmem:[%s3 + $0x308] sm:$0xff]
    %v990 = vld [vmem:[%s4] sm:$0x3]
    %v992 = vlaneseq
    %v993 = vshrl.u32 %v992, 7
    %v994 = vsub.s32 0, %v993
    %v995 = vrot.slane %v990, %v994
    %v996 = vlaneseq
    %v997 = vshrl.u32 %v996, 7
    %v998 = vsub.s32 1, %v997
    %v999 = vrot.slane %v990, %v998
    %vm1002 = vcmask 64512
    %v1004 = vsel %vm1002, %v891, 0
    %1006 = vmatprep.subr.mxu0 %v893
    %1007 = vmatpush1.msra.mxu0 %v892
    %1008 = vmatprep.subr.mxu0 %v895
    %1009 = vmatpush1.msra.mxu0 %v894
    %1010 = vmatprep.subr.mxu0 %v897
    %1011 = vmatpush1.msra.mxu0 %v896
    %1012 = vmatprep.subr.mxu0 %v899
    %1013 = vmatpush1.msra.mxu0 %v898
    %1014 = vmatprep.subr.mxu0 %v901
    %1015 = vmatpush1.msra.mxu0 %v900
    %1016 = vmatprep.subr.mxu0 %v903
    %1017 = vmatpush1.msra.mxu0 %v902
    %1018 = vmatprep.subr.mxu0 %v905
    %1019 = vmatpush1.msra.mxu0 %v904
    %1020 = vmatprep.subr.mxu0 %v907
    %1021 = vmatpush1.msra.mxu0 %v906
    %1022 = vmatprep.subr.mxu0 %v909
    %1023 = vmatpush1.msra.mxu0 %v908
    %1024 = vmatprep.subr.mxu0 %v911
    %1025 = vmatpush1.msra.mxu0 %v910
    %1026 = vmatprep.subr.mxu0 %v913
    %1027 = vmatpush1.msra.mxu0 %v912
    %1028 = vmatprep.subr.mxu0 %v915
    %1029 = vmatpush1.msra.mxu0 %v914
    %1030 = vmatprep.subr.mxu0 %v917
    %1031 = vmatpush1.msra.mxu0 %v916
    %1032 = vmatprep.subr.mxu0 %v919
    %1033 = vmatpush1.msra.mxu0 %v918
    %1034 = vmatprep.subr.mxu0 %v921
    %1035 = vmatpush1.msra.mxu0 %v920
    %1036 = vmatprep.subr.mxu0 %v923
    %1037 = vmatpush1.msra.mxu0 %v922
    %1038 = vmatprep.subr.mxu0 %v925
    %1039 = vmatpush1.msra.mxu0 %v924
    %1040 = vmatprep.subr.mxu0 %v927
    %1041 = vmatpush1.msra.mxu0 %v926
    %1042 = vmatprep.subr.mxu0 %v929
    %1043 = vmatpush1.msra.mxu0 %v928
    %1044 = vmatprep.subr.mxu0 %v931
    %1045 = vmatpush1.msra.mxu0 %v930
    %1046 = vmatprep.subr.mxu0 %v933
    %1047 = vmatpush1.msra.mxu0 %v932
    %1048 = vmatprep.subr.mxu0 %v935
    %1049 = vmatpush1.msra.mxu0 %v934
    %1050 = vmatprep.subr.mxu0 %v937
    %1051 = vmatpush1.msra.mxu0 %v936
    %1052 = vmatprep.subr.mxu0 %v939
    %1053 = vmatpush1.msra.mxu0 %v938
    %1054 = vmatprep.subr.mxu0 %v941
    %1055 = vmatpush1.msra.mxu0 %v940
    %1056 = vmatprep.subr.mxu0 %v943
    %1057 = vmatpush1.msra.mxu0 %v942
    %1058 = vmatprep.subr.mxu0 %v945
    %1059 = vmatpush1.msra.mxu0 %v944
    %1060 = vmatprep.subr.mxu0 %v947
    %1061 = vmatpush1.msra.mxu0 %v946
    %1062 = vmatprep.subr.mxu0 %v949
    %1063 = vmatpush1.msra.mxu0 %v948
    %1064 = vmatprep.subr.mxu0 %v951
    %1065 = vmatpush1.msra.mxu0 %v950
    %1066 = vmatprep.subr.mxu0 %v953
    %1067 = vmatpush1.msra.mxu0 %v952
    %1068 = vmatprep.subr.mxu0 %v955
    %1069 = vmatpush1.msra.mxu0 %v954
    %1070 = vmatprep.mubr.f32.mxu0 %v889
    %1071 = vmatmul.mubr.f32.gmra.mrb[0].mxu0 %v888
    %v1072 = vpop.f32.mrb[0].mxu0
    %v1073 = vadd.f32 %v995, %v1072
    %v1074 = vpop.f32.mrb[0].mxu0
    %v1075 = vadd.f32 %v999, %v1074
    %1076 = vdwg.mxu0
    %1077 = vmatprep.subr.mxu0 %v957
    %1078 = vmatpush1.msra.mxu0 %v956
    %1079 = vmatprep.subr.mxu0 %v959
    %1080 = vmatpush1.msra.mxu0 %v958
    %1081 = vmatprep.subr.mxu0 %v961
    %1082 = vmatpush1.msra.mxu0 %v960
    %1083 = vmatprep.subr.mxu0 %v963
    %1084 = vmatpush1.msra.mxu0 %v962
    %1085 = vmatprep.subr.mxu0 %v965
    %1086 = vmatpush1.msra.mxu0 %v964
    %1087 = vmatprep.subr.mxu0 %v967
    %1088 = vmatpush1.msra.mxu0 %v966
    %1089 = vmatprep.subr.mxu0 %v969
    %1090 = vmatpush1.msra.mxu0 %v968
    %1091 = vmatprep.subr.mxu0 %v971
    %1092 = vmatpush1.msra.mxu0 %v970
    %1093 = vmatprep.subr.mxu0 %v973
    %1094 = vmatpush1.msra.mxu0 %v972
    %1095 = vmatprep.subr.mxu0 %v975
    %1096 = vmatpush1.msra.mxu0 %v974
    %1097 = vmatprep.subr.mxu0 %v977
    %1098 = vmatpush1.msra.mxu0 %v976
    %1099 = vmatprep.subr.mxu0 %v979
    %1100 = vmatpush1.msra.mxu0 %v978
    %1101 = vmatprep.subr.mxu0 %v981
    %1102 = vmatpush1.msra.mxu0 %v980
    %1103 = vmatprep.subr.mxu0 %v983
    %1104 = vmatpush1.msra.mxu0 %v982
    %1105 = vmatprep.subr.mxu0 %v985
    %1106 = vmatpush1.msra.mxu0 %v984
    %1107 = vmatprep.subr.mxu0 %v987
    %1108 = vmatpush1.msra.mxu0 %v986
    %1109 = vmatprep.subr.mxu0 %v989
    %1110 = vmatpush1.msra.mxu0 %v988
    %1111 = vmatprep.subr.mxu0 0.0
    %1112 = vmatpush1.msra.mxu0 0.0
    %1113 = vmatprep.subr.mxu0 0.0
    %1114 = vmatpush1.msra.mxu0 0.0
    %1115 = vmatprep.subr.mxu0 0.0
    %1116 = vmatpush1.msra.mxu0 0.0
    %1117 = vmatprep.subr.mxu0 0.0
    %1118 = vmatpush1.msra.mxu0 0.0
    %1119 = vmatprep.subr.mxu0 0.0
    %1120 = vmatpush1.msra.mxu0 0.0
    %1121 = vmatprep.subr.mxu0 0.0
    %1122 = vmatpush1.msra.mxu0 0.0
    %1123 = vmatprep.subr.mxu0 0.0
    %1124 = vmatpush1.msra.mxu0 0.0
    %1125 = vmatprep.subr.mxu0 0.0
    %1126 = vmatpush1.msra.mxu0 0.0
    %1127 = vmatprep.subr.mxu0 0.0
    %1128 = vmatpush1.msra.mxu0 0.0
    %1129 = vmatprep.subr.mxu0 0.0
    %1130 = vmatpush1.msra.mxu0 0.0
    %1131 = vmatprep.subr.mxu0 0.0
    %1132 = vmatpush1.msra.mxu0 0.0
    %1133 = vmatprep.subr.mxu0 0.0
    %1134 = vmatpush1.msra.mxu0 0.0
    %1135 = vmatprep.subr.mxu0 0.0
    %1136 = vmatpush1.msra.mxu0 0.0
    %1137 = vmatprep.subr.mxu0 0.0
    %1138 = vmatpush1.msra.mxu0 0.0
    %1139 = vmatprep.subr.mxu0 0.0
    %1140 = vmatpush1.msra.mxu0 0.0
    %1141 = vmatprep.mubr.f32.mxu0 %v1004
    %1142 = vmatmul.mubr.f32.gmra.mrb[0].mxu0 %v890
    %v1143 = vpop.f32.mrb[0].mxu0
    %v1144 = vadd.f32 %v1073, %v1143
    %v1145 = vpop.f32.mrb[0].mxu0
    %v1146 = vadd.f32 %v1075, %v1145
    %1147 = vdwg.mxu0
    %v1148 = vmax.f32 %v1144, 0.0
    %v1149 = vmax.f32 %v1146, 0.0
    %v1152 = vcombine.low %v1148, %v1149
    %v1154 = vunpack.c.l.s4 1983009808
    %v1155 = vunpack.c.0.s8 %v1154
    %v1156 = vlaneseq
    %v1157 = vshrl.u32 %v1156, 7
    %v1158 = vsub.s32 %v1155, %v1157
    %v1159 = vrot.slane %v1152, %v1158
    %vm1161 = vcmask 1041408
    %vm1162 = vcmask 125954
    %vm1163 = vmor %vm1162, %vm1161
    %1164 = vst.msk [vmem:[#allocation2] sm:$0xf] %vm1163, %v1159
    // Predicated region
    $region22: #{tpu_custom_call.1} parent=1 // pred_check
      _
    $region23: #{tpu_custom_call.1} parent=1 // pred_check_branch
      %1166 = sbr.rel (0) target = $region25
    $region24: #{tpu_custom_call.1} parent=1 // pred_region
      %s1168 = ssub.s32 64, 64
      %1169 = vsyncadd [#allocation3], %s1168
      %s1171 = sshll.u32 [#allocation2], 4
      %s1172 = int_to_ptr.vmem [resolvable:$true] %s1171
      %1174 = dma.vmem_to_hbm [thread:$0]  %s1172, 64, %s5, [#allocation3]
    $region25: #{tpu_custom_call.1} parent=1 // pred_fallthru
      _
    // Predicated region
    $region26: #{tpu_custom_call.1} parent=1 // pred_check
      _
    $region27: #{tpu_custom_call.1} parent=1 // pred_check_branch
      %1176 = sbr.rel (0) target = $region29
    $region28: #{tpu_custom_call.1} parent=1 // pred_region
      %1177 = dma.done [#allocation3], 64
    $region29: #{tpu_custom_call.1} parent=1 // pred_fallthru
      _
    %1178 = vsyncpa [#allocation3], 1

</llo_original>
